<compile_context>
chip_gen: v6e
topology: v6e:2x2x1
jax: 0.10.0
libtpu: 0.0.40
codegen_flags: <defaults>
</compile_context>

<pallas_src>
import numpy as np
import jax
import jax.numpy as jnp
from jax import lax
from jax.experimental import pallas as pl
from jax.experimental.pallas import tpu as pltpu


# ----------------------------------------------------------------------------- helpers
def _round_up(x, m):
    return (x + m - 1) // m * m


def _choose_row_tile(m, max_tile=256):
    """m must already be a multiple of 8. Returns (m_padded, row_tile)."""
    if m <= max_tile:
        return m, m
    m_pad = _round_up(m, max_tile)
    return m_pad, max_tile


def _choose_col_tile(n_pad, preferred=(512, 256, 128)):
    """n_pad is a multiple of 128; pick the largest preferred tile dividing it."""
    for t in preferred:
        if n_pad % t == 0:
            return t
    return n_pad


# --------------------------------------------------------------- kernel 1/3: matmul+bias
def matmul_bias_kernel(a_ref, w_ref, bias_ref, o_ref):
    # One (TM, K) x (K, TN) MXU matmul per grid point, bias folded in, f32 accumulate.
    o_ref[...] = (jnp.dot(a_ref[...], w_ref[...],
                          preferred_element_type=jnp.float32)
                  + bias_ref[...]).astype(o_ref.dtype)


def matmul_bias(a, w, bias, *, tm, tn, out_dtype=jnp.float32):
    """a: (M, K) bf16, w: (K, N) bf16, bias: (1, N) f32 -> (M, N) out_dtype.

    Grid is (M//tm, N//tn); K is kept whole (small contraction dims here).
    """
    M, K = a.shape
    _, N = w.shape
    grid = (M // tm, N // tn)
    return pl.pallas_call(
        matmul_bias_kernel,
        out_shape=jax.ShapeDtypeStruct((M, N), out_dtype),
        grid_spec=pltpu.PrefetchScalarGridSpec(
            num_scalar_prefetch=0,
            grid=grid,
            in_specs=[pl.BlockSpec((tm, K), lambda i, j: (i, 0)),
                      pl.BlockSpec((K, tn), lambda i, j: (0, j)),
                      pl.BlockSpec((1, tn), lambda i, j: (0, j))],
            out_specs=pl.BlockSpec((tm, tn), lambda i, j: (i, j)),
        ),
        compiler_params=pltpu.CompilerParams(
            dimension_semantics=("parallel", "parallel"),
            vmem_limit_bytes=32 * 1024 * 1024),
    )(a, w, bias)


# ------------------------------------------------------ kernel 2/3: LSTM recurrence over T
def lstm_recurrence_kernel(gates_in_ref, whh_ref, h_out_ref, h_sc, c_sc):
    """One timestep per grid iteration.

    gates_in_ref : (1, B, 4H) f32   precomputed x_t @ W_ih^T + b (bias folded in)
    whh_ref      : (H, 4H)    bf16  = W_hh^T, gate-block padded
    h_out_ref    : (1, B, H)  bf16  hidden state for this step (consumed by FC matmul)
    h_sc, c_sc   : (B, H)     f32   VMEM scratch carried across grid steps
    """
    H = h_sc.shape[-1]
    t = pl.program_id(0)

    @pl.when(t == 0)
    def _():
        h_sc[...] = jnp.zeros_like(h_sc)
        c_sc[...] = jnp.zeros_like(c_sc)

    h = h_sc[...]
    gates = gates_in_ref[0] + jnp.dot(h.astype(whh_ref.dtype), whh_ref[...],
                                      preferred_element_type=jnp.float32)
    # Gate order matches PyTorch LSTM: i, f, g, o. Slices are 128-lane aligned (H padded).
    i = jax.nn.sigmoid(gates[:, 0 * H:1 * H])
    f = jax.nn.sigmoid(gates[:, 1 * H:2 * H])
    g = jnp.tanh(gates[:, 2 * H:3 * H])
    o = jax.nn.sigmoid(gates[:, 3 * H:4 * H])
    c_new = f * c_sc[...] + i * g
    h_new = o * jnp.tanh(c_new)
    c_sc[...] = c_new
    h_sc[...] = h_new
    h_out_ref[0] = h_new.astype(h_out_ref.dtype)


def run_lstm_recurrence(gates_in_tbg, whh, h_dtype=jnp.bfloat16):
    T, B, G = gates_in_tbg.shape
    H = whh.shape[0]
    return pl.pallas_call(
        lstm_recurrence_kernel,
        out_shape=jax.ShapeDtypeStruct((T, B, H), h_dtype),
        grid_spec=pltpu.PrefetchScalarGridSpec(
            num_scalar_prefetch=0,
            grid=(T,),
            in_specs=[pl.BlockSpec((1, B, G), lambda t: (t, 0, 0)),
                      pl.BlockSpec((H, G), lambda t: (0, 0))],
            out_specs=pl.BlockSpec((1, B, H), lambda t: (t, 0, 0)),
            scratch_shapes=[pltpu.VMEM((B, H), jnp.float32),
                            pltpu.VMEM((B, H), jnp.float32)],
        ),
        compiler_params=pltpu.CompilerParams(
            dimension_semantics=("arbitrary",),   # recurrence: sequential over T
            vmem_limit_bytes=32 * 1024 * 1024),
    )(gates_in_tbg, whh)


# ---------------------------------------------------------------------------- packing glue
def packed_order_indices(lengths):
    """Reproduce torch pack_padded_sequence(enforce_sorted=False) data row order."""
    lengths = np.asarray(lengths)
    sorted_idx = np.argsort(-lengths, kind="stable")  # descending length
    t_idx, b_idx = [], []
    for t in range(int(lengths.max())):
        for bi in sorted_idx:
            if lengths[bi] > t:
                t_idx.append(t)
                b_idx.append(int(bi))
    return np.array(t_idx, np.int32), np.array(b_idx, np.int32)


# ---------------------------------------------------------------------------- parameters
def make_params(key, embed_dim, hidden_dim, vocab_size):
    ks = jax.random.split(key, 6)
    s = 0.1
    emb_tbl = s * jax.random.normal(ks[0], (vocab_size, embed_dim), jnp.float32)
    # PyTorch LSTM weights: W_ih (4H, E), W_hh (4H, H); stored transposed.
    wih = s * jax.random.normal(ks[1], (embed_dim, 4 * hidden_dim), jnp.float32)
    whh = s * jax.random.normal(ks[2], (hidden_dim, 4 * hidden_dim), jnp.float32)
    b_ih = s * jax.random.normal(ks[3], (4 * hidden_dim,), jnp.float32)
    b_hh = s * jax.random.normal(ks[4], (4 * hidden_dim,), jnp.float32)
    wfc = s * jax.random.normal(ks[5], (hidden_dim, vocab_size), jnp.float32)
    bfc = jnp.zeros((vocab_size,), jnp.float32)
    return {
        "embedding": emb_tbl,
        "wih": wih,
        "whh": whh,
        "b": (b_ih + b_hh).reshape(1, 4 * hidden_dim),
        "wfc": wfc,
        "bfc": bfc.reshape(1, vocab_size),
    }


def prepare_kernel_params(params, compute_dtype=jnp.bfloat16):
    """Pad/cast parameters into the layout the kernels expect.

    Gate blocks (i,f,g,o) are padded individually so every gate slice starts on a
    128-lane boundary. Padding is zero so padded hidden units remain exactly zero.
    """
    E, G = params["wih"].shape
    H = G // 4
    V = params["wfc"].shape[1]
    E_pad = _round_up(E, 128)
    H_pad = _round_up(H, 128)
    V_pad = _round_up(V, 128)

    def pad_gatewise(w, rows, rows_pad):
        w4 = w.reshape(rows, 4, H)
        out = jnp.zeros((rows_pad, 4, H_pad), jnp.float32)
        out = out.at[:rows, :, :H].set(w4)
        return out.reshape(rows_pad, 4 * H_pad)

    wih_p = pad_gatewise(params["wih"], E, E_pad).astype(compute_dtype)
    whh_p = pad_gatewise(params["whh"], H, H_pad).astype(compute_dtype)
    b_p = pad_gatewise(params["b"], 1, 1)                      # (1, 4*H_pad) f32
    wfc_p = (jnp.zeros((H_pad, V_pad), jnp.float32)
             .at[:H, :V].set(params["wfc"]).astype(compute_dtype))
    bfc_p = jnp.zeros((1, V_pad), jnp.float32).at[:, :V].set(params["bfc"])

    return {
        "embedding": params["embedding"],
        "wih": wih_p, "whh": whh_p, "b": b_p, "wfc": wfc_p, "bfc": bfc_p,
        "E": E, "E_pad": E_pad, "H": H, "H_pad": H_pad, "V": V, "V_pad": V_pad,
        "compute_dtype": compute_dtype,
    }


# ------------------------------------------------------------------------------- forward
def rnn_decoder_forward(kp, features, captions, lengths):
    """features: (B, E) f32, captions: (B, Tc) int32, lengths: python ints / np array.

    Returns logits for the packed sequence: (sum(lengths), vocab_size).
    """
    emb = kp["embedding"][captions]                                   # (B, Tc, E)
    inputs = jnp.concatenate([features[:, None, :], emb], axis=1)     # (B, T, E)
    B, T, E = inputs.shape
    E_pad, H_pad, V_pad = kp["E_pad"], kp["H_pad"], kp["V_pad"]
    B_pad = max(_round_up(B, 8), 8)

    # Time-major, pad batch (sublanes) and feature (lanes) dims with zeros.
    x = jnp.transpose(inputs, (1, 0, 2)).astype(jnp.float32)          # (T, B, E)
    x = jnp.pad(x, ((0, 0), (0, B_pad - B), (0, E_pad - E)))
    x_flat = x.reshape(T * B_pad, E_pad).astype(kp["compute_dtype"])

    M = T * B_pad
    M_pad, TM = _choose_row_tile(M)
    if M_pad != M:
        x_flat = jnp.pad(x_flat, ((0, M_pad - M), (0, 0)))

    # (1) Hoisted input projection: one big MXU matmul, bias folded in.
    TG = _choose_col_tile(4 * H_pad)
    gates_in = matmul_bias(x_flat, kp["wih"], kp["b"], tm=TM, tn=TG)  # (M_pad, 4H_pad) f32
    gates_in = gates_in[:M].reshape(T, B_pad, 4 * H_pad)

    # (2) Serial recurrence over T (pipelined grid, h/c in VMEM scratch).
    # TODO(synk): timesteps past each sequence's length are still computed and later
    # discarded by the packed gather (matches the module's numerics; wasted work only).
    h_seq = run_lstm_recurrence(gates_in, kp["whh"],
                                h_dtype=kp["compute_dtype"])          # (T, B_pad, H_pad)

    # (3) Hoisted vocab projection: one tiled (T*B, H) @ (H, V) matmul.
    h_flat = h_seq.reshape(M, H_pad)
    if M_pad != M:
        h_flat = jnp.pad(h_flat, ((0, M_pad - M), (0, 0)))
    TV = _choose_col_tile(V_pad)
    logits = matmul_bias(h_flat, kp["wfc"], kp["bfc"], tm=TM, tn=TV)  # (M_pad, V_pad) f32
    logits = logits[:M].reshape(T, B_pad, V_pad)

    # Packed-sequence gather (host-side index plumbing, same as pack_padded_sequence).
    t_idx, b_idx = packed_order_indices(lengths)
    return logits[t_idx, b_idx, :kp["V"]]                             # (sum(lengths), V)


# ------------------------------------------------------------------------------ reference
def reference_forward(params, features, captions, lengths):
    """Pure-JAX f32 reference mirroring the PyTorch forward."""
    emb = params["embedding"][captions]
    inputs = jnp.concatenate([features[:, None, :], emb], axis=1)     # (B, T, E)
    B, T, E = inputs.shape
    H = params["whh"].shape[0]

    def step(carry, x_t):
        h, c = carry
        gates = x_t @ params["wih"] + h @ params["whh"] + params["b"]
        i = jax.nn.sigmoid(gates[:, 0 * H:1 * H])
        f = jax.nn.sigmoid(gates[:, 1 * H:2 * H])
        g = jnp.tanh(gates[:, 2 * H:3 * H])
        o = jax.nn.sigmoid(gates[:, 3 * H:4 * H])
        c = f * c + i * g
        h = o * jnp.tanh(c)
        return (h, c), h

    x_tbe = jnp.transpose(inputs, (1, 0, 2))
    (_, _), hs = lax.scan(step, (jnp.zeros((B, H)), jnp.zeros((B, H))), x_tbe)
    logits_tbv = hs @ params["wfc"] + params["bfc"]
    t_idx, b_idx = packed_order_indices(lengths)
    return logits_tbv[t_idx, b_idx, :]


if __name__ == "__main__":
    # Small shapes: feature_dim == embed_dim (required by torch.cat in forward).
    B = 2
    embed_dim = 32        # == feature_dim
    hidden_dim = 32
    vocab_size = 40
    cap_len = 8           # LSTM sees T = cap_len + 1 steps

    key = jax.random.PRNGKey(0)
    k_par, k_feat, k_cap = jax.random.split(key, 3)

    params = make_params(k_par, embed_dim, hidden_dim, vocab_size)
    kparams = prepare_kernel_params(params, compute_dtype=jnp.bfloat16)
    features = jax.random.normal(k_feat, (B, embed_dim), jnp.float32)
    captions = jax.random.randint(k_cap, (B, cap_len), 0, vocab_size, jnp.int32)
    lengths = [6, 9]      # unsorted -> exercises enforce_sorted=False ordering

    out = rnn_decoder_forward(kparams, features, captions, lengths)
    out = jax.block_until_ready(out)

    ref = jax.block_until_ready(reference_forward(params, features, captions, lengths))
    assert out.shape == (sum(lengths), vocab_size)
    # Slightly looser tolerance than pure f32: matmul operands are bf16 (f32 accumulate).
    assert np.allclose(np.asarray(out), np.asarray(ref), rtol=2e-2, atol=2e-2)

    print("KERNEL_OK")
</pallas_src>

<mosaic_0001>
module attributes {stable_mosaic.version = 11 : i64} {
  func.func @matmul_bias_kernel(%arg0: i32, %arg1: i32, %arg2: memref<72x128xbf16, #tpu.memory_space<vmem>>, %arg3: memref<128x512xbf16, #tpu.memory_space<vmem>>, %arg4: memref<1x512xf32, #tpu.memory_space<vmem>>, %arg5: memref<72x512xf32, #tpu.memory_space<vmem>>) attributes {dimension_semantics = [#tpu.dimension_semantics<parallel>, #tpu.dimension_semantics<parallel>], iteration_bounds = array<i64: 1, 1>, scalar_prefetch = 0 : i64, scratch_operands = 0 : i64, tpu.core_type = #tpu.core_type<tc>, window_params = [{transform_indices = @transform_0, window_bounds = array<i64: 72, 128>}, {transform_indices = @transform_1, window_bounds = array<i64: 128, 512>}, {transform_indices = @transform_2, window_bounds = array<i64: 1, 512>}, {transform_indices = @transform_3, window_bounds = array<i64: 72, 512>}]} {
    %c0 = arith.constant 0 : index
    %c0_0 = arith.constant 0 : index
    %0 = vector.load %arg2[%c0, %c0_0] : memref<72x128xbf16, #tpu.memory_space<vmem>>, vector<72x128xbf16>
    %c0_1 = arith.constant 0 : index
    %c0_2 = arith.constant 0 : index
    %1 = vector.load %arg3[%c0_1, %c0_2] : memref<128x512xbf16, #tpu.memory_space<vmem>>, vector<128x512xbf16>
    %cst = arith.constant dense<0.000000e+00> : vector<72x512xf32>
    %2 = tpu.matmul %0, %1, %cst {dimension_numbers = #tpu.dot_dimension_numbers<[1], [0], [0], [1], [0, 0, 1, 1], [], []>} : vector<72x128xbf16>, vector<128x512xbf16>, vector<72x512xf32> -> vector<72x512xf32>
    %c0_3 = arith.constant 0 : index
    %c0_4 = arith.constant 0 : index
    %3 = vector.load %arg4[%c0_3, %c0_4] : memref<1x512xf32, #tpu.memory_space<vmem>>, vector<1x512xf32>
    %4 = vector.broadcast %3 : vector<1x512xf32> to vector<72x512xf32>
    %5 = arith.addf %2, %4 : vector<72x512xf32>
    %c0_5 = arith.constant 0 : index
    %c0_6 = arith.constant 0 : index
    %6 = vector.load %arg5[%c0_5, %c0_6] : memref<72x512xf32, #tpu.memory_space<vmem>>, vector<72x512xf32>
    tpu.vector_store %arg5[%c0_5, %c0_6], %5 {strides = array<i32>} : memref<72x512xf32, #tpu.memory_space<vmem>>, vector<72x512xf32>,
    return
  }
  func.func @transform_0(%arg0: i32, %arg1: i32) -> (i32, i32) {
    %c0_i32 = arith.constant 0 : i32
    %c0_i32_0 = arith.constant 0 : i32
    return %arg0, %c0_i32 : i32, i32
  }
  func.func @transform_1(%arg0: i32, %arg1: i32) -> (i32, i32) {
    %c0_i32 = arith.constant 0 : i32
    %c0_i32_0 = arith.constant 0 : i32
    return %c0_i32, %arg1 : i32, i32
  }
  func.func @transform_2(%arg0: i32, %arg1: i32) -> (i32, i32) {
    %c0_i32 = arith.constant 0 : i32
    %c0_i32_0 = arith.constant 0 : i32
    return %c0_i32, %arg1 : i32, i32
  }
  func.func @transform_3(%arg0: i32, %arg1: i32) -> (i32, i32) {
    %c0_i32 = arith.constant 0 : i32
    return %arg0, %arg1 : i32, i32
  }
}

</mosaic_0001>

<llo_original>
// kernel: tpu_custom_call.1
$region0: #{tpu_custom_call.1}
  #allocation0 [shape = 'u32[]', space=smem, size = 0x4, offset = 0x4, fixed_abs, tag = 'smem constant byte address 0x4 - core index']
  #allocation1 [shape = 'u32[144,128]{1,0:T(1,128)}', space=vmem, size = 0x12000, scoped, tag = 'internal scratch']
  %s0 = inlined_call_operand.hbm [shape: bf16[72,128], index: 0, kind: input, shape index: {}]
  %s1 = inlined_call_operand.hbm [shape: bf16[128,512], index: 1, kind: input, shape index: {}]
  %s2 = inlined_call_operand.hbm [shape: f32[1,512], index: 2, kind: input, shape index: {}]
  %s3 = inlined_call_operand.hbm [shape: f32[72,512], index: 3, kind: output, shape index: {}]
  %s4 = sld [smem:[#allocation0]]
  $region34: #{tpu_custom_call.1} parent=0
    _
  %s6 = ssub.s32 1, %s4
  %s7 = scalar_select 0, %s6, %s4
  $region1: #{tpu_custom_call.1} parent=0
    #allocation2 [shape = 'u8[18432]{0}', space=vmem, size = 0x4800, scoped, tag = 'input window, operand 0, single buffered']
    #allocation3 [shape = 's32[1]{0}', space=sflag, size = 0x4, scoped, tag = 'scoped memory for tpu_custom_call.1']
    #allocation4 [shape = 's32[1]{0}', space=sflag, size = 0x4, scoped, tag = 'scoped memory for tpu_custom_call.1']
    #allocation5 [shape = 'u8[131072]{0}', space=vmem, size = 0x20000, scoped, tag = 'input window, operand 1, single buffered']
    #allocation6 [shape = 's32[1]{0}', space=sflag, size = 0x4, scoped, tag = 'scoped memory for tpu_custom_call.1']
    #allocation7 [shape = 'u8[2048]{0}', space=vmem, size = 0x800, scoped, tag = 'input window, operand 2, single buffered']
    #allocation8 [shape = 'u8[147456]{0}', space=vmem, size = 0x24000, scoped, tag = 'output window, operand 0, single buffered']
    %8 = vsyncpa [#allocation3], 0
    %9 = vsyncpa [#allocation6], 0
    %10 = vsyncpa [#allocation4], 0
    // Predicated region
    $region2: #{tpu_custom_call.1} parent=1 // pred_check
      _
    $region3: #{tpu_custom_call.1} parent=1 // pred_check_branch
      %12 = sbr.rel (0) target = $region5
    $region4: #{tpu_custom_call.1} parent=1 // pred_region
      %s14 = ssub.s32 576, 576
      %15 = vsyncadd [#allocation3], %s14
      %s16 = sshll.u32 [#allocation2], 4
      %s17 = int_to_ptr.vmem [resolvable:$true] %s16
      %22 = dma.hbm_to_vmem [thread:$0]  %s0, 576, %s17, [#allocation3], 64, 64, 4
    $region5: #{tpu_custom_call.1} parent=1 // pred_fallthru
      _
    // Predicated region
    $region6: #{tpu_custom_call.1} parent=1 // pred_check
      _
    $region7: #{tpu_custom_call.1} parent=1 // pred_check_branch
      %24 = sbr.rel (0) target = $region9
    $region8: #{tpu_custom_call.1} parent=1 // pred_region
      %s26 = ssub.s32 4096, 4096
      %27 = vsyncadd [#allocation6], %s26
      %s28 = sshll.u32 [#allocation5], 4
      %s29 = int_to_ptr.vmem [resolvable:$true] %s28
      %34 = dma.hbm_to_vmem [thread:$0]  %s1, 4096, %s29, [#allocation6], 256, 256, 16
    $region9: #{tpu_custom_call.1} parent=1 // pred_fallthru
      _
    // Predicated region
    $region10: #{tpu_custom_call.1} parent=1 // pred_check
      _
    $region11: #{tpu_custom_call.1} parent=1 // pred_check_branch
      %36 = sbr.rel (0) target = $region13
    $region12: #{tpu_custom_call.1} parent=1 // pred_region
      %s38 = ssub.s32 64, 64
      %39 = vsyncadd [#allocation6], %s38
      %s41 = sshll.u32 [#allocation7], 4
      %s42 = int_to_ptr.vmem [resolvable:$true] %s41
      %44 = dma.hbm_to_vmem [thread:$0]  %s2, 64, %s42, [#allocation6]
    $region13: #{tpu_custom_call.1} parent=1 // pred_fallthru
      _
    // Predicated region
    $region14: #{tpu_custom_call.1} parent=1 // pred_check
      _
    $region15: #{tpu_custom_call.1} parent=1 // pred_check_branch
      %46 = sbr.rel (0) target = $region17
    $region16: #{tpu_custom_call.1} parent=1 // pred_region
      %47 = dma.done [#allocation3], 576
    $region17: #{tpu_custom_call.1} parent=1 // pred_fallthru
      _
    // Predicated region
    $region18: #{tpu_custom_call.1} parent=1 // pred_check
      _
    $region19: #{tpu_custom_call.1} parent=1 // pred_check_branch
      %49 = sbr.rel (0) target = $region21
    $region20: #{tpu_custom_call.1} parent=1 // pred_region
      %50 = dma.done [#allocation6], 4096
    $region21: #{tpu_custom_call.1} parent=1 // pred_fallthru
      _
    // Predicated region
    $region22: #{tpu_custom_call.1} parent=1 // pred_check
      _
    $region23: #{tpu_custom_call.1} parent=1 // pred_check_branch
      %52 = sbr.rel (0) target = $region25
    $region24: #{tpu_custom_call.1} parent=1 // pred_region
      %53 = dma.done [#allocation6], 64
    $region25: #{tpu_custom_call.1} parent=1 // pred_fallthru
      _
    %v55 = vld [vmem:[#allocation2] sm:$0xf]
    %v56 = vld [vmem:[#allocation2 + $0x4] sm:$0xf]
    %v57 = vld [vmem:[#allocation2 + $0x8] sm:$0xf]
    %v58 = vld [vmem:[#allocation2 + $0xc] sm:$0xf]
    %v59 = vld [vmem:[#allocation2 + $0x10] sm:$0xf]
    %v60 = vld [vmem:[#allocation2 + $0x14] sm:$0xf]
    %v61 = vld [vmem:[#allocation2 + $0x18] sm:$0xf]
    %v62 = vld [vmem:[#allocation2 + $0x1c] sm:$0xf]
    %v63 = vld [vmem:[#allocation2 + $0x20] sm:$0xf]
    %v64 = vld [vmem:[#allocation5] sm:$0xff]
    %v65 = vld [vmem:[#allocation5 + $0x8] sm:$0xff]
    %v66 = vld [vmem:[#allocation5 + $0x10] sm:$0xff]
    %v67 = vld [vmem:[#allocation5 + $0x18] sm:$0xff]
    %v68 = vld [vmem:[#allocation5 + $0x20] sm:$0xff]
    %v69 = vld [vmem:[#allocation5 + $0x28] sm:$0xff]
    %v70 = vld [vmem:[#allocation5 + $0x30] sm:$0xff]
    %v71 = vld [vmem:[#allocation5 + $0x38] sm:$0xff]
    %v72 = vld [vmem:[#allocation5 + $0x40] sm:$0xff]
    %v73 = vld [vmem:[#allocation5 + $0x48] sm:$0xff]
    %v74 = vld [vmem:[#allocation5 + $0x50] sm:$0xff]
    %v75 = vld [vmem:[#allocation5 + $0x58] sm:$0xff]
    %v76 = vld [vmem:[#allocation5 + $0x60] sm:$0xff]
    %v77 = vld [vmem:[#allocation5 + $0x68] sm:$0xff]
    %v78 = vld [vmem:[#allocation5 + $0x70] sm:$0xff]
    %v79 = vld [vmem:[#allocation5 + $0x78] sm:$0xff]
    %v80 = vld [vmem:[#allocation5 + $0x80] sm:$0xff]
    %v81 = vld [vmem:[#allocation5 + $0x88] sm:$0xff]
    %v82 = vld [vmem:[#allocation5 + $0x90] sm:$0xff]
    %v83 = vld [vmem:[#allocation5 + $0x98] sm:$0xff]
    %v84 = vld [vmem:[#allocation5 + $0xa0] sm:$0xff]
    %v85 = vld [vmem:[#allocation5 + $0xa8] sm:$0xff]
    %v86 = vld [vmem:[#allocation5 + $0xb0] sm:$0xff]
    %v87 = vld [vmem:[#allocation5 + $0xb8] sm:$0xff]
    %v88 = vld [vmem:[#allocation5 + $0xc0] sm:$0xff]
    %v89 = vld [vmem:[#allocation5 + $0xc8] sm:$0xff]
    %v90 = vld [vmem:[#allocation5 + $0xd0] sm:$0xff]
    %v91 = vld [vmem:[#allocation5 + $0xd8] sm:$0xff]
    %v92 = vld [vmem:[#allocation5 + $0xe0] sm:$0xff]
    %v93 = vld [vmem:[#allocation5 + $0xe8] sm:$0xff]
    %v94 = vld [vmem:[#allocation5 + $0xf0] sm:$0xff]
    %v95 = vld [vmem:[#allocation5 + $0xf8] sm:$0xff]
    %v96 = vld [vmem:[#allocation7] sm:$0xf]
    %v98 = vlaneseq
    %v99 = vshrl.u32 %v98, 7
    %v100 = vsub.s32 0, %v99
    %v101 = vrot.slane %v96, %v100
    %v102 = vlaneseq
    %v103 = vshrl.u32 %v102, 7
    %v104 = vsub.s32 1, %v103
    %v105 = vrot.slane %v96, %v104
    %v106 = vlaneseq
    %v107 = vshrl.u32 %v106, 7
    %v108 = vsub.s32 2, %v107
    %v109 = vrot.slane %v96, %v108
    %v110 = vlaneseq
    %v111 = vshrl.u32 %v110, 7
    %v112 = vsub.s32 3, %v111
    %v113 = vrot.slane %v96, %v112
    %v127 = vunpack.c.l.b16 %v55
    %v128 = vunpack.c.l.b16 %v56
    %v129 = vunpack.c.l.b16 %v57
    %v130 = vunpack.c.l.b16 %v58
    %v131 = vunpack.c.l.b16 %v59
    %v132 = vunpack.c.l.b16 %v60
    %v133 = vunpack.c.l.b16 %v61
    %v134 = vunpack.c.l.b16 %v62
    %v135 = vunpack.c.l.b16 %v63
    %v136 = vpack.c.b16 %v128, %v127
    %v137 = vpack.c.b16 %v130, %v129
    %v138 = vpack.c.b16 %v132, %v131
    %v139 = vpack.c.b16 %v134, %v133
    %v140 = vpack.c.b16 %v135, %v135
    %v178 = vunpack.c.l.b16 %v64
    %v179 = vunpack.c.h.b16 %v64
    %v180 = vunpack.c.l.b16 %v65
    %v181 = vunpack.c.h.b16 %v65
    %v182 = vunpack.c.l.b16 %v66
    %v183 = vunpack.c.h.b16 %v66
    %v184 = vunpack.c.l.b16 %v67
    %v185 = vunpack.c.h.b16 %v67
    %v186 = vunpack.c.l.b16 %v68
    %v187 = vunpack.c.h.b16 %v68
    %v188 = vunpack.c.l.b16 %v69
    %v189 = vunpack.c.h.b16 %v69
    %v190 = vunpack.c.l.b16 %v70
    %v191 = vunpack.c.h.b16 %v70
    %v192 = vunpack.c.l.b16 %v71
    %v193 = vunpack.c.h.b16 %v71
    %v194 = vunpack.c.l.b16 %v72
    %v195 = vunpack.c.h.b16 %v72
    %v196 = vunpack.c.l.b16 %v73
    %v197 = vunpack.c.h.b16 %v73
    %v198 = vunpack.c.l.b16 %v74
    %v199 = vunpack.c.h.b16 %v74
    %v200 = vunpack.c.l.b16 %v75
    %v201 = vunpack.c.h.b16 %v75
    %v202 = vunpack.c.l.b16 %v76
    %v203 = vunpack.c.h.b16 %v76
    %v204 = vunpack.c.l.b16 %v77
    %v205 = vunpack.c.h.b16 %v77
    %v206 = vunpack.c.l.b16 %v78
    %v207 = vunpack.c.h.b16 %v78
    %v208 = vunpack.c.l.b16 %v79
    %v209 = vunpack.c.h.b16 %v79
    %v210 = vunpack.c.l.b16 %v80
    %v211 = vunpack.c.h.b16 %v80
    %v212 = vunpack.c.l.b16 %v81
    %v213 = vunpack.c.h.b16 %v81
    %v214 = vunpack.c.l.b16 %v82
    %v215 = vunpack.c.h.b16 %v82
    %v216 = vunpack.c.l.b16 %v83
    %v217 = vunpack.c.h.b16 %v83
    %v218 = vunpack.c.l.b16 %v84
    %v219 = vunpack.c.h.b16 %v84
    %v220 = vunpack.c.l.b16 %v85
    %v221 = vunpack.c.h.b16 %v85
    %v222 = vunpack.c.l.b16 %v86
    %v223 = vunpack.c.h.b16 %v86
    %v224 = vunpack.c.l.b16 %v87
    %v225 = vunpack.c.h.b16 %v87
    %v226 = vunpack.c.l.b16 %v88
    %v227 = vunpack.c.h.b16 %v88
    %v228 = vunpack.c.l.b16 %v89
    %v229 = vunpack.c.h.b16 %v89
    %v230 = vunpack.c.l.b16 %v90
    %v231 = vunpack.c.h.b16 %v90
    %v232 = vunpack.c.l.b16 %v91
    %v233 = vunpack.c.h.b16 %v91
    %v234 = vunpack.c.l.b16 %v92
    %v235 = vunpack.c.h.b16 %v92
    %v236 = vunpack.c.l.b16 %v93
    %v237 = vunpack.c.h.b16 %v93
    %v238 = vunpack.c.l.b16 %v94
    %v239 = vunpack.c.h.b16 %v94
    %v240 = vunpack.c.l.b16 %v95
    %v241 = vunpack.c.h.b16 %v95
    %v242 = vpack.c.b16 %v182, %v178
    %v243 = vpack.c.b16 %v183, %v179
    %v244 = vpack.c.b16 %v184, %v180
    %v245 = vpack.c.b16 %v185, %v181
    %v246 = vpack.c.b16 %v190, %v186
    %v247 = vpack.c.b16 %v191, %v187
    %v248 = vpack.c.b16 %v192, %v188
    %v249 = vpack.c.b16 %v193, %v189
    %v250 = vpack.c.b16 %v198, %v194
    %v251 = vpack.c.b16 %v199, %v195
    %v252 = vpack.c.b16 %v200, %v196
    %v253 = vpack.c.b16 %v201, %v197
    %v254 = vpack.c.b16 %v206, %v202
    %v255 = vpack.c.b16 %v207, %v203
    %v256 = vpack.c.b16 %v208, %v204
    %v257 = vpack.c.b16 %v209, %v205
    %v258 = vpack.c.b16 %v214, %v210
    %v259 = vpack.c.b16 %v215, %v211
    %v260 = vpack.c.b16 %v216, %v212
    %v261 = vpack.c.b16 %v217, %v213
    %v262 = vpack.c.b16 %v222, %v218
    %v263 = vpack.c.b16 %v223, %v219
    %v264 = vpack.c.b16 %v224, %v220
    %v265 = vpack.c.b16 %v225, %v221
    %v266 = vpack.c.b16 %v230, %v226
    %v267 = vpack.c.b16 %v231, %v227
    %v268 = vpack.c.b16 %v232, %v228
    %v269 = vpack.c.b16 %v233, %v229
    %v270 = vpack.c.b16 %v238, %v234
    %v271 = vpack.c.b16 %v239, %v235
    %v272 = vpack.c.b16 %v240, %v236
    %v273 = vpack.c.b16 %v241, %v237
    %306 = vmatprep.subr.bf16.mxu0 %v271
    %307 = vmatpush1.bf16.msra.mxu0 %v270
    %308 = vmatprep.subr.bf16.mxu0 %v267
    %309 = vmatpush1.bf16.msra.mxu0 %v266
    %310 = vmatprep.subr.bf16.mxu0 %v263
    %311 = vmatpush1.bf16.msra.mxu0 %v262
    %312 = vmatprep.subr.bf16.mxu0 %v259
    %313 = vmatpush1.bf16.msra.mxu0 %v258
    %314 = vmatprep.subr.bf16.mxu0 %v255
    %315 = vmatpush1.bf16.msra.mxu0 %v254
    %316 = vmatprep.subr.bf16.mxu0 %v251
    %317 = vmatpush1.bf16.msra.mxu0 %v250
    %318 = vmatprep.subr.bf16.mxu0 %v247
    %319 = vmatpush1.bf16.msra.mxu0 %v246
    %320 = vmatprep.subr.bf16.mxu0 %v243
    %321 = vmatpush1.bf16.msra.mxu0 %v242
    %322 = vmatprep.subr.bf16.mxu0 0
    %323 = vmatpush2.bf16.msra.mxu0 0
    %324 = vmatprep.subr.bf16.mxu0 0
    %325 = vmatpush2.bf16.msra.mxu0 0
    %326 = vmatprep.subr.bf16.mxu0 0
    %327 = vmatpush2.bf16.msra.mxu0 0
    %328 = vmatprep.subr.bf16.mxu0 0
    %329 = vmatpush2.bf16.msra.mxu0 0
    %330 = vmatprep.subr.bf16.mxu0 0
    %331 = vmatpush2.bf16.msra.mxu0 0
    %332 = vmatprep.subr.bf16.mxu0 0
    %333 = vmatpush2.bf16.msra.mxu0 0
    %334 = vmatprep.subr.bf16.mxu0 0
    %335 = vmatpush2.bf16.msra.mxu0 0
    %336 = vmatprep.subr.bf16.mxu0 0
    %337 = vmatpush2.bf16.msra.mxu0 0
    %338 = vmatprep.mubr.bf16.mxu0 0
    %339 = vmatmul.mubr.bf16.gmra.mxu0 %v136
    %v340 = vpop.f32.mrf.mxu0
    %v341 = vadd.f32 %v101, %v340
    %v342 = vpop.f32.mrf.mxu0
    %v343 = vadd.f32 %v105, %v342
    %v344 = vpop.f32.mrf.mxu0
    %v345 = vadd.f32 %v101, %v344
    %v346 = vpop.f32.mrf.mxu0
    %v347 = vadd.f32 %v105, %v346
    %348 = vmatprep.mubr.bf16.mxu0 0
    %349 = vmatmul.mubr.bf16.gmra.mxu0 %v137
    %v350 = vpop.f32.mrf.mxu0
    %v351 = vadd.f32 %v101, %v350
    %v352 = vpop.f32.mrf.mxu0
    %v353 = vadd.f32 %v105, %v352
    %v354 = vpop.f32.mrf.mxu0
    %v355 = vadd.f32 %v101, %v354
    %v356 = vpop.f32.mrf.mxu0
    %v357 = vadd.f32 %v105, %v356
    %358 = vmatprep.mubr.bf16.mxu0 0
    %359 = vmatmul.mubr.bf16.gmra.mxu0 %v138
    %v360 = vpop.f32.mrf.mxu0
    %v361 = vadd.f32 %v101, %v360
    %v362 = vpop.f32.mrf.mxu0
    %v363 = vadd.f32 %v105, %v362
    %v364 = vpop.f32.mrf.mxu0
    %v365 = vadd.f32 %v101, %v364
    %v366 = vpop.f32.mrf.mxu0
    %v367 = vadd.f32 %v105, %v366
    %368 = vmatprep.mubr.bf16.mxu0 0
    %369 = vmatmul.mubr.bf16.gmra.mxu0 %v139
    %v370 = vpop.f32.mrf.mxu0
    %v371 = vadd.f32 %v101, %v370
    %v372 = vpop.f32.mrf.mxu0
    %v373 = vadd.f32 %v105, %v372
    %v374 = vpop.f32.mrf.mxu0
    %v375 = vadd.f32 %v101, %v374
    %v376 = vpop.f32.mrf.mxu0
    %v377 = vadd.f32 %v105, %v376
    %378 = vmatprep.mubr.bf16.mxu0 0
    %379 = vmatmul.mubr.bf16.gmra.mxu0 %v140
    %v380 = vpop.f32.mrf.mxu0
    %v381 = vadd.f32 %v101, %v380
    %v382 = vpop.f32.mrf.mxu0
    %v383 = vadd.f32 %v105, %v382
    %v384 = vpop.f32.mrf.mxu0
    %v385 = vpop.f32.mrf.mxu0
    %386 = vdwg.mxu0
    %387 = vmatprep.subr.bf16.mxu0 %v273
    %388 = vmatpush1.bf16.msra.mxu0 %v272
    %389 = vmatprep.subr.bf16.mxu0 %v269
    %390 = vmatpush1.bf16.msra.mxu0 %v268
    %391 = vmatprep.subr.bf16.mxu0 %v265
    %392 = vmatpush1.bf16.msra.mxu0 %v264
    %393 = vmatprep.subr.bf16.mxu0 %v261
    %394 = vmatpush1.bf16.msra.mxu0 %v260
    %395 = vmatprep.subr.bf16.mxu0 %v257
    %396 = vmatpush1.bf16.msra.mxu0 %v256
    %397 = vmatprep.subr.bf16.mxu0 %v253
    %398 = vmatpush1.bf16.msra.mxu0 %v252
    %399 = vmatprep.subr.bf16.mxu0 %v249
    %400 = vmatpush1.bf16.msra.mxu0 %v248
    %401 = vmatprep.subr.bf16.mxu0 %v245
    %402 = vmatpush1.bf16.msra.mxu0 %v244
    %403 = vmatprep.subr.bf16.mxu0 0
    %404 = vmatpush2.bf16.msra.mxu0 0
    %405 = vmatprep.subr.bf16.mxu0 0
    %406 = vmatpush2.bf16.msra.mxu0 0
    %407 = vmatprep.subr.bf16.mxu0 0
    %408 = vmatpush2.bf16.msra.mxu0 0
    %409 = vmatprep.subr.bf16.mxu0 0
    %410 = vmatpush2.bf16.msra.mxu0 0
    %411 = vmatprep.subr.bf16.mxu0 0
    %412 = vmatpush2.bf16.msra.mxu0 0
    %413 = vmatprep.subr.bf16.mxu0 0
    %414 = vmatpush2.bf16.msra.mxu0 0
    %415 = vmatprep.subr.bf16.mxu0 0
    %416 = vmatpush2.bf16.msra.mxu0 0
    %417 = vmatprep.subr.bf16.mxu0 0
    %418 = vmatpush2.bf16.msra.mxu0 0
    %419 = vmatprep.mubr.bf16.mxu0 0
    %420 = vmatmul.mubr.bf16.gmra.mxu0 %v136
    %v421 = vpop.f32.mrf.mxu0
    %v422 = vadd.f32 %v109, %v421
    %v423 = vpop.f32.mrf.mxu0
    %v424 = vadd.f32 %v113, %v423
    %v425 = vpop.f32.mrf.mxu0
    %v426 = vadd.f32 %v109, %v425
    %v427 = vpop.f32.mrf.mxu0
    %v428 = vadd.f32 %v113, %v427
    %429 = vmatprep.mubr.bf16.mxu0 0
    %430 = vmatmul.mubr.bf16.gmra.mxu0 %v137
    %v431 = vpop.f32.mrf.mxu0
    %v432 = vadd.f32 %v109, %v431
    %v433 = vpop.f32.mrf.mxu0
    %v434 = vadd.f32 %v113, %v433
    %v435 = vpop.f32.mrf.mxu0
    %v436 = vadd.f32 %v109, %v435
    %v437 = vpop.f32.mrf.mxu0
    %v438 = vadd.f32 %v113, %v437
    %439 = vmatprep.mubr.bf16.mxu0 0
    %440 = vmatmul.mubr.bf16.gmra.mxu0 %v138
    %v441 = vpop.f32.mrf.mxu0
    %v442 = vadd.f32 %v109, %v441
    %v443 = vpop.f32.mrf.mxu0
    %v444 = vadd.f32 %v113, %v443
    %v445 = vpop.f32.mrf.mxu0
    %v446 = vadd.f32 %v109, %v445
    %v447 = vpop.f32.mrf.mxu0
    %v448 = vadd.f32 %v113, %v447
    %449 = vmatprep.mubr.bf16.mxu0 0
    %450 = vmatmul.mubr.bf16.gmra.mxu0 %v139
    %v451 = vpop.f32.mrf.mxu0
    %v452 = vadd.f32 %v109, %v451
    %v453 = vpop.f32.mrf.mxu0
    %v454 = vadd.f32 %v113, %v453
    %v455 = vpop.f32.mrf.mxu0
    %v456 = vadd.f32 %v109, %v455
    %v457 = vpop.f32.mrf.mxu0
    %v458 = vadd.f32 %v113, %v457
    %459 = vmatprep.mubr.bf16.mxu0 0
    %460 = vmatmul.mubr.bf16.gmra.mxu0 %v140
    %v461 = vpop.f32.mrf.mxu0
    %v462 = vadd.f32 %v109, %v461
    %v463 = vpop.f32.mrf.mxu0
    %v464 = vadd.f32 %v113, %v463
    %v465 = vpop.f32.mrf.mxu0
    %v466 = vpop.f32.mrf.mxu0
    %467 = vdwg.mxu0
    %468 = vst [vmem:[#allocation8] sm:$0xff] %v341
    %469 = vst [vmem:[#allocation8 + $0x8] sm:$0xff] %v343
    %470 = vst [vmem:[#allocation8 + $0x10] sm:$0xff] %v422
    %471 = vst [vmem:[#allocation8 + $0x18] sm:$0xff] %v424
    %472 = vst [vmem:[#allocation8 + $0x20] sm:$0xff] %v345
    %473 = vst [vmem:[#allocation8 + $0x28] sm:$0xff] %v347
    %474 = vst [vmem:[#allocation8 + $0x30] sm:$0xff] %v426
    %475 = vst [vmem:[#allocation8 + $0x38] sm:$0xff] %v428
    %476 = vst [vmem:[#allocation8 + $0x40] sm:$0xff] %v351
    %477 = vst [vmem:[#allocation8 + $0x48] sm:$0xff] %v353
    %478 = vst [vmem:[#allocation8 + $0x50] sm:$0xff] %v432
    %479 = vst [vmem:[#allocation8 + $0x58] sm:$0xff] %v434
    %480 = vst [vmem:[#allocation8 + $0x60] sm:$0xff] %v355
    %481 = vst [vmem:[#allocation8 + $0x68] sm:$0xff] %v357
    %482 = vst [vmem:[#allocation8 + $0x70] sm:$0xff] %v436
    %483 = vst [vmem:[#allocation8 + $0x78] sm:$0xff] %v438
    %484 = vst [vmem:[#allocation8 + $0x80] sm:$0xff] %v361
    %485 = vst [vmem:[#allocation8 + $0x88] sm:$0xff] %v363
    %486 = vst [vmem:[#allocation8 + $0x90] sm:$0xff] %v442
    %487 = vst [vmem:[#allocation8 + $0x98] sm:$0xff] %v444
    %488 = vst [vmem:[#allocation8 + $0xa0] sm:$0xff] %v365
    %489 = vst [vmem:[#allocation8 + $0xa8] sm:$0xff] %v367
    %490 = vst [vmem:[#allocation8 + $0xb0] sm:$0xff] %v446
    %491 = vst [vmem:[#allocation8 + $0xb8] sm:$0xff] %v448
    %492 = vst [vmem:[#allocation8 + $0xc0] sm:$0xff] %v371
    %493 = vst [vmem:[#allocation8 + $0xc8] sm:$0xff] %v373
    %494 = vst [vmem:[#allocation8 + $0xd0] sm:$0xff] %v452
    %495 = vst [vmem:[#allocation8 + $0xd8] sm:$0xff] %v454
    %496 = vst [vmem:[#allocation8 + $0xe0] sm:$0xff] %v375
    %497 = vst [vmem:[#allocation8 + $0xe8] sm:$0xff] %v377
    %498 = vst [vmem:[#allocation8 + $0xf0] sm:$0xff] %v456
    %499 = vst [vmem:[#allocation8 + $0xf8] sm:$0xff] %v458
    %500 = vst [vmem:[#allocation8 + $0x100] sm:$0xff] %v381
    %501 = vst [vmem:[#allocation8 + $0x108] sm:$0xff] %v383
    %502 = vst [vmem:[#allocation8 + $0x110] sm:$0xff] %v462
    %503 = vst [vmem:[#allocation8 + $0x118] sm:$0xff] %v464
    // Predicated region
    $region26: #{tpu_custom_call.1} parent=1 // pred_check
      _
    $region27: #{tpu_custom_call.1} parent=1 // pred_check_branch
      %505 = sbr.rel (0) target = $region29
    $region28: #{tpu_custom_call.1} parent=1 // pred_region
      %s507 = ssub.s32 4608, 4608
      %508 = vsyncadd [#allocation4], %s507
      %s509 = sshll.u32 [#allocation8], 4
      %s510 = int_to_ptr.vmem [resolvable:$true] %s509
      %515 = dma.vmem_to_hbm [thread:$0]  %s510, 4608, %s3, [#allocation4], 512, 512, 32
    $region29: #{tpu_custom_call.1} parent=1 // pred_fallthru
      _
    // Predicated region
    $region30: #{tpu_custom_call.1} parent=1 // pred_check
      _
    $region31: #{tpu_custom_call.1} parent=1 // pred_check_branch
      %517 = sbr.rel (0) target = $region33
    $region32: #{tpu_custom_call.1} parent=1 // pred_region
      %518 = dma.done [#allocation4], 4608
    $region33: #{tpu_custom_call.1} parent=1 // pred_fallthru
      _
    %519 = vsyncpa [#allocation3], 1
    %520 = vsyncpa [#allocation6], 1
    %521 = vsyncpa [#allocation4], 1

</llo_original>
